<compile_context>
chip_gen: v7x
topology: tpu7x:2x2x1
jax: 0.10.0
libtpu: 0.0.40
codegen_flags: <defaults>
</compile_context>

<pallas_src>
import functools

import jax
import jax.numpy as jnp
from jax import lax
from jax.experimental import pallas as pl
from jax.experimental.pallas import tpu as pltpu


MXU_DTYPE = jnp.bfloat16     # matmul-operand dtype (accumulation stays f32)


def _vmem_limit_bytes():
    cap = 128 * 1024 * 1024
    try:
        info = pltpu.get_tpu_info()
        cap = int(getattr(info, "vmem_capacity_bytes", cap))
    except Exception:
        pass
    # leave headroom for compiler-internal scratch; cap at 96 MiB
    return max(32 * 1024 * 1024, min(cap - 16 * 1024 * 1024, 96 * 1024 * 1024))


_VMEM_LIMIT_BYTES = _vmem_limit_bytes()


def _cparams(dims):
    return pltpu.CompilerParams(dimension_semantics=dims,
                                vmem_limit_bytes=_VMEM_LIMIT_BYTES)


# ----------------------------------------------------------------------------
# Row-tiled linear:  out = x @ w + b   (w stored bf16, x cast in-kernel)
# ----------------------------------------------------------------------------
def _linear_kernel(x_ref, w_ref, b_ref, o_ref):
    x = x_ref[...].astype(MXU_DTYPE)
    o_ref[...] = (jnp.dot(x, w_ref[...], preferred_element_type=jnp.float32)
                  + b_ref[...])


def _linear(x, w, b, row_tile=1024):
    rows, k = x.shape
    n = w.shape[1]
    tr = rows if rows <= row_tile else row_tile
    row = lambda i: (i, 0)
    full = lambda i: (0, 0)
    return pl.pallas_call(
        _linear_kernel,
        grid=(pl.cdiv(rows, tr),),
        in_specs=[
            pl.BlockSpec((tr, k), row),
            pl.BlockSpec((k, n), full),
            pl.BlockSpec((1, n), full),
        ],
        out_specs=pl.BlockSpec((tr, n), row),
        out_shape=jax.ShapeDtypeStruct((rows, n), jnp.float32),
        compiler_params=_cparams(("parallel",)),
    )(x, w, b)


# ----------------------------------------------------------------------------
# Fused query projection:  out = (tgt + pos) @ [W_off | W_attn] + b
# (with_pos_embed add fused into the single concatenated projection matmul)
# ----------------------------------------------------------------------------
def _qproj_kernel(tgt_ref, pos_ref, w_ref, b_ref, o_ref):
    q = (tgt_ref[...] + pos_ref[...]).astype(MXU_DTYPE)
    o_ref[...] = (jnp.dot(q, w_ref[...], preferred_element_type=jnp.float32)
                  + b_ref[...])


def _qproj(tgt, pos, w, b, row_tile=1024):
    rows, k = tgt.shape
    n = w.shape[1]
    tr = rows if rows <= row_tile else row_tile
    row = lambda i: (i, 0)
    full = lambda i: (0, 0)
    return pl.pallas_call(
        _qproj_kernel,
        grid=(pl.cdiv(rows, tr),),
        in_specs=[
            pl.BlockSpec((tr, k), row),
            pl.BlockSpec((tr, k), row),
            pl.BlockSpec((k, n), full),
            pl.BlockSpec((1, n), full),
        ],
        out_specs=pl.BlockSpec((tr, n), row),
        out_shape=jax.ShapeDtypeStruct((rows, n), jnp.float32),
        compiler_params=_cparams(("parallel",)),
    )(tgt, pos, w, b)


# ----------------------------------------------------------------------------
# Fused decoder-layer epilogue:
#   norm3( t + lin2(relu(lin1(t))) )  where  t = norm1( tgt + out_proj(core) )
# (all dropouts are identity; LayerNorm math in f32, matmul operands in bf16)
# ----------------------------------------------------------------------------
def _epilogue_kernel(core_ref, tgt_ref, wo_ref, bo_ref, g1_ref, b1_ref,
                     w1_ref, bb1_ref, w2_ref, bb2_ref, g3_ref, b3_ref,
                     o_ref, *, eps):
    attn = (jnp.dot(core_ref[...].astype(MXU_DTYPE), wo_ref[...],
                    preferred_element_type=jnp.float32) + bo_ref[...])
    z = tgt_ref[...] + attn
    mu = jnp.mean(z, axis=-1, keepdims=True)
    var = jnp.mean(jnp.square(z - mu), axis=-1, keepdims=True)
    t = (z - mu) * lax.rsqrt(var + eps) * g1_ref[...] + b1_ref[...]

    h = (jnp.dot(t.astype(MXU_DTYPE), w1_ref[...],
                 preferred_element_type=jnp.float32) + bb1_ref[...])
    h = jnp.maximum(h, 0.0)                       # relu
    y = (jnp.dot(h.astype(MXU_DTYPE), w2_ref[...],
                 preferred_element_type=jnp.float32) + bb2_ref[...])
    z2 = t + y
    mu2 = jnp.mean(z2, axis=-1, keepdims=True)
    var2 = jnp.mean(jnp.square(z2 - mu2), axis=-1, keepdims=True)
    o_ref[...] = (z2 - mu2) * lax.rsqrt(var2 + eps) * g3_ref[...] + b3_ref[...]


def _attn_out_ffn(core, tgt, params, row_tile=1024, eps=1e-5):
    rows, d_model = core.shape
    d_ffn = params['lin1_w'].shape[1]
    tr = rows if rows <= row_tile else row_tile
    row = lambda i: (i, 0)
    full = lambda i: (0, 0)
    return pl.pallas_call(
        functools.partial(_epilogue_kernel, eps=eps),
        grid=(pl.cdiv(rows, tr),),
        in_specs=[
            pl.BlockSpec((tr, d_model), row),          # core (MSDA output)
            pl.BlockSpec((tr, d_model), row),          # pre_tgt residual
            pl.BlockSpec((d_model, d_model), full),    # out_proj w (bf16)
            pl.BlockSpec((1, d_model), full),          # out_proj b
            pl.BlockSpec((1, d_model), full),          # norm1 gamma
            pl.BlockSpec((1, d_model), full),          # norm1 beta
            pl.BlockSpec((d_model, d_ffn), full),      # lin1 w (bf16)
            pl.BlockSpec((1, d_ffn), full),            # lin1 b
            pl.BlockSpec((d_ffn, d_model), full),      # lin2 w (bf16)
            pl.BlockSpec((1, d_model), full),          # lin2 b
            pl.BlockSpec((1, d_model), full),          # norm3 gamma
            pl.BlockSpec((1, d_model), full),          # norm3 beta
        ],
        out_specs=pl.BlockSpec((tr, d_model), row),
        out_shape=jax.ShapeDtypeStruct((rows, d_model), jnp.float32),
        compiler_params=_cparams(("parallel",)),
    )(core, tgt,
      params['out_proj_w'], params['out_proj_b'],
      params['norm1_g'], params['norm1_b'],
      params['lin1_w'], params['lin1_b'],
      params['lin2_w'], params['lin2_b'],
      params['norm3_g'], params['norm3_b'])


# ----------------------------------------------------------------------------
# Multi-scale deformable attention core.
#   value:       (N, Len_in, d_model) bf16  -- heads are static lane slices
#   locx / locy: (N, Lq, M*L*P) in [0, 1]
#   attn logits: (N, Lq, M*L*P)
#   out:         (N, Lq, d_model) f32       -- lane-dense block per tile
# Bilinear grid_sample (align_corners=False, zeros padding) is expressed as a
# PER-LEVEL sparse weighting matrix A_l (tq, H_l*W_l) accumulated over points,
# then contracted against that level's value slice on the MXU (f32 acc).
# ----------------------------------------------------------------------------
def _msda_core_kernel(value_ref, locx_ref, locy_ref, attn_ref, o_ref, *,
                      spatial_shapes, level_starts, n_heads, n_levels,
                      n_points, d_head):
    lp = n_levels * n_points
    tq = locx_ref.shape[0]

    lx_all = locx_ref[...]        # (tq, M*L*P)
    ly_all = locy_ref[...]
    lg_all = attn_ref[...]

    # Per-level column iotas, hoisted (JAX does not CSE broadcast_in_dim).
    iotas = [lax.broadcasted_iota(jnp.int32, (tq, h * w), 1)
             for (h, w) in spatial_shapes]

    head_outs = []
    for m in range(n_heads):
        # softmax over (levels * points) for this head -- f32 math
        logits = lg_all[:, m * lp:(m + 1) * lp]
        logits = logits - jnp.max(logits, axis=-1, keepdims=True)
        e = jnp.exp(logits)
        inv = pl.reciprocal(jnp.sum(e, axis=-1, keepdims=True), approx=True)
        aw = e * inv                                        # (tq, L*P)

        acc = jnp.zeros((tq, d_head), jnp.float32)
        for lvl in range(n_levels):
            H, W = spatial_shapes[lvl]
            HW = H * W
            start = level_starts[lvl]
            iota_l = iotas[lvl]

            A = jnp.zeros((tq, HW), jnp.float32)
            for p in range(n_points):
                cc = lvl * n_points + p                     # within-head col
                c = m * lp + cc                             # global col
                a_qp = aw[:, cc:cc + 1]                     # (tq, 1)
                # grid_sample, align_corners=False: pixel = loc * size - 0.5
                x = lx_all[:, c:c + 1] * float(W) - 0.5
                y = ly_all[:, c:c + 1] * float(H) - 0.5
                x0 = jnp.floor(x)
                y0 = jnp.floor(y)
                fx = x - x0
                fy = y - y0
                # corner weights as products (attn weight folded into wy*)
                wx0 = 1.0 - fx
                wx1 = fx
                wy0 = (1.0 - fy) * a_qp
                wy1 = fy * a_qp
                # validity predicates (zeros padding) computed once per point
                vx0 = (x0 >= 0.0) & (x0 <= float(W - 1))
                vx1 = (x0 >= -1.0) & (x0 <= float(W - 2))
                vy0 = (y0 >= 0.0) & (y0 <= float(H - 1))
                vy1 = (y0 >= -1.0) & (y0 <= float(H - 2))
                base = (y0.astype(jnp.int32) * W + x0.astype(jnp.int32))
                # invalid corners get zero weight BEFORE the one-hot, so any
                # flat-index aliasing of out-of-range corners is benign.
                corners = ((base,         wx0 * wy0, vx0 & vy0),
                           (base + 1,     wx1 * wy0, vx1 & vy0),
                           (base + W,     wx0 * wy1, vx0 & vy1),
                           (base + W + 1, wx1 * wy1, vx1 & vy1))
                for idx, wgt, valid in corners:
                    w_c = jnp.where(valid, wgt, 0.0)            # (tq, 1)
                    A = A + jnp.where(idx == iota_l, w_c, 0.0)  # (tq, HW)

            # per-level MXU contraction against this head's lane slice
            v_lm = value_ref[start:start + HW, m * d_head:(m + 1) * d_head]
            acc = acc + jnp.dot(A.astype(MXU_DTYPE), v_lm,
                                preferred_element_type=jnp.float32)
        head_outs.append(acc)

    # single lane-dense store (no per-head masked partial stores)
    o_ref[...] = jnp.concatenate(head_outs, axis=-1).astype(o_ref.dtype)


def msda_core(value, locx, locy, attn_logits, spatial_shapes, level_starts,
              n_heads, n_levels, n_points, q_tile=128):
    """value: (N, Len_in, d_model) bf16; locx/locy/attn: (N, Lq, M*L*P) f32.
    Returns (N, Lq, d_model) f32."""
    N, len_in, d_model = value.shape
    Lq = locx.shape[1]
    d_head = d_model // n_heads
    mlp = n_heads * n_levels * n_points
    tq = Lq if Lq <= q_tile else q_tile      # q_tile is a multiple of 8

    kern = functools.partial(
        _msda_core_kernel,
        spatial_shapes=tuple(spatial_shapes),
        level_starts=tuple(level_starts),
        n_heads=n_heads, n_levels=n_levels, n_points=n_points,
        d_head=d_head,
    )
    # value index_map constant across q axis (innermost) -> fetched once per b
    return pl.pallas_call(
        kern,
        grid=(N, pl.cdiv(Lq, tq)),
        in_specs=[
            pl.BlockSpec((None, len_in, d_model), lambda b, q: (b, 0, 0)),
            pl.BlockSpec((None, tq, mlp), lambda b, q: (b, q, 0)),
            pl.BlockSpec((None, tq, mlp), lambda b, q: (b, q, 0)),
            pl.BlockSpec((None, tq, mlp), lambda b, q: (b, q, 0)),
        ],
        out_specs=pl.BlockSpec((None, tq, d_model), lambda b, q: (b, q, 0)),
        out_shape=jax.ShapeDtypeStruct((N, Lq, d_model), jnp.float32),
        compiler_params=_cparams(("parallel", "parallel")),
    )(value, locx, locy, attn_logits)


# ----------------------------------------------------------------------------
# Decoder layer forward (glue in plain JAX, hot path in Pallas kernels above)
# ----------------------------------------------------------------------------
def deformable_decoder_layer(params, pre_tgt, pre_query_pos,
                             spatial_shapes, level_start_index,
                             src, pre_ref_pts, src_padding_mask=None, *,
                             n_heads, n_levels, n_points):
    N, Lq, d_model = pre_tgt.shape
    len_in = src.shape[1]
    n_off = n_heads * n_levels * n_points * 2
    n_att = n_heads * n_levels * n_points

    # ---- MSDeformAttn(query=with_pos_embed(pre_tgt, pos), ref_pts, src) ----
    value = _linear(src.reshape(N * len_in, d_model),
                    params['value_proj_w'], params['value_proj_b'])
    value = value.reshape(N, len_in, d_model)
    if src_padding_mask is not None:
        value = jnp.where(src_padding_mask[..., None], 0.0, value)
    value = value.astype(MXU_DTYPE)           # bf16 MXU operand, halves DMA

    # fused with_pos_embed + (sampling-offset | attention-weight) projection
    qo = _qproj(pre_tgt.reshape(N * Lq, d_model),
                pre_query_pos.reshape(N * Lq, d_model),
                params['q_proj_w'], params['q_proj_b'])
    off = qo[:, :n_off].reshape(N, Lq, n_heads, n_levels, n_points, 2)
    attn_logits = qo[:, n_off:].reshape(N, Lq, n_att)

    # sampling locations; offset_normalizer = (W_l, H_l).
    norm = jnp.array([[w, h] for (h, w) in spatial_shapes], dtype=jnp.float32)
    loc = (pre_ref_pts[:, :, None, :, None, :]
           + off / norm[None, None, None, :, None, :])     # (N,Lq,M,L,P,2)
    locx = loc[..., 0].reshape(N, Lq, n_att)
    locy = loc[..., 1].reshape(N, Lq, n_att)

    core = msda_core(value, locx, locy, attn_logits, spatial_shapes,
                     level_start_index, n_heads, n_levels, n_points)

    # ---- out_proj + residual + norm1 + FFN + residual + norm3 (one kernel) --
    out = _attn_out_ffn(core.reshape(N * Lq, d_model),
                        pre_tgt.reshape(N * Lq, d_model), params)
    return out.reshape(N, Lq, d_model)


def init_params(key, d_model, d_ffn, n_heads, n_levels, n_points):
    # Deterministic synthetic initialization (shapes match the PyTorch module).
    # TODO(synk): the original MSDeformAttn grid-pattern bias init is replaced
    # with small random values (any deterministic init is acceptable here).
    n_off = n_heads * n_levels * n_points * 2
    n_att = n_heads * n_levels * n_points
    ks = jax.random.split(key, 12)
    s = 0.1

    def w(k, shape):
        return (s * jax.random.normal(k, shape)).astype(jnp.float32)

    row = lambda v: v.reshape(1, -1)
    samp_off_w = w(ks[2], (d_model, n_off))
    samp_off_b = w(ks[3], (n_off,))
    attn_w = w(ks[4], (d_model, n_att))
    attn_b = w(ks[5], (n_att,))

    return {
        'value_proj_w': w(ks[0], (d_model, d_model)).astype(MXU_DTYPE),
        'value_proj_b': row(w(ks[1], (d_model,))),
        # precomputed concatenated (sampling-offset | attention-weight) proj
        'q_proj_w': jnp.concatenate([samp_off_w, attn_w], 1).astype(MXU_DTYPE),
        'q_proj_b': row(jnp.concatenate([samp_off_b, attn_b], 0)),
        'out_proj_w': w(ks[6], (d_model, d_model)).astype(MXU_DTYPE),
        'out_proj_b': row(w(ks[7], (d_model,))),
        'norm1_g': row(jnp.ones((d_model,), jnp.float32)),
        'norm1_b': row(jnp.zeros((d_model,), jnp.float32)),
        'lin1_w': w(ks[8], (d_model, d_ffn)).astype(MXU_DTYPE),
        'lin1_b': row(w(ks[9], (d_ffn,))),
        'lin2_w': w(ks[10], (d_ffn, d_model)).astype(MXU_DTYPE),
        'lin2_b': row(w(ks[11], (d_model,))),
        'norm3_g': row(jnp.ones((d_model,), jnp.float32)),
        'norm3_b': row(jnp.zeros((d_model,), jnp.float32)),
    }


if __name__ == "__main__":
    # small config consistent with the module (d_model=32, d_ffn=64, 2 levels,
    # 4 heads, 2 points; batch=2, num queries=8)
    N, Lq, d_model, d_ffn = 2, 8, 32, 64
    n_heads, n_levels, n_points = 4, 2, 2
    spatial_shapes = ((8, 8), (4, 4))          # (H_l, W_l) per level
    level_start_index = (0, 64)
    len_in = sum(h * w for h, w in spatial_shapes)   # 80

    key = jax.random.PRNGKey(0)
    k_in, k_par = jax.random.split(key)
    ki = jax.random.split(k_in, 4)
    pre_tgt = jax.random.normal(ki[0], (N, Lq, d_model), jnp.float32)
    pre_query_pos = jax.random.normal(ki[1], (N, Lq, d_model), jnp.float32)
    src = jax.random.normal(ki[2], (N, len_in, d_model), jnp.float32)
    pre_ref_pts = jax.random.uniform(ki[3], (N, Lq, n_levels, 2),
                                     dtype=jnp.float32)

    params = init_params(k_par, d_model, d_ffn, n_heads, n_levels, n_points)

    out = deformable_decoder_layer(
        params, pre_tgt, pre_query_pos, spatial_shapes, level_start_index,
        src, pre_ref_pts, src_padding_mask=None,
        n_heads=n_heads, n_levels=n_levels, n_points=n_points)
    out = jax.block_until_ready(out)
    assert out.shape == (N, Lq, d_model)
    assert bool(jnp.all(jnp.isfinite(out)))
    print("KERNEL_OK")
</pallas_src>

<mosaic_0001>
module attributes {stable_mosaic.version = 11 : i64} {
  func.func @_linear_kernel(%arg0: i32, %arg1: memref<160x32xf32, #tpu.memory_space<vmem>>, %arg2: memref<32x32xbf16, #tpu.memory_space<vmem>>, %arg3: memref<1x32xf32, #tpu.memory_space<vmem>>, %arg4: memref<160x32xf32, #tpu.memory_space<vmem>>) attributes {dimension_semantics = [#tpu.dimension_semantics<parallel>], iteration_bounds = array<i64: 1>, scalar_prefetch = 0 : i64, scratch_operands = 0 : i64, tpu.core_type = #tpu.core_type<tc>, window_params = [{transform_indices = @transform_0, window_bounds = array<i64: 160, 32>}, {pipeline_mode = #tpu.pipeline_mode<synchronous>, transform_indices = @transform_1, window_bounds = array<i64: 32, 32>}, {pipeline_mode = #tpu.pipeline_mode<synchronous>, transform_indices = @transform_2, window_bounds = array<i64: 1, 32>}, {transform_indices = @transform_3, window_bounds = array<i64: 160, 32>}]} {
    %c0 = arith.constant 0 : index
    %c0_0 = arith.constant 0 : index
    %0 = vector.load %arg1[%c0, %c0_0] : memref<160x32xf32, #tpu.memory_space<vmem>>, vector<160x32xf32>
    %1 = arith.truncf %0 : vector<160x32xf32> to vector<160x32xbf16>
    %c0_1 = arith.constant 0 : index
    %c0_2 = arith.constant 0 : index
    %2 = vector.load %arg2[%c0_1, %c0_2] : memref<32x32xbf16, #tpu.memory_space<vmem>>, vector<32x32xbf16>
    %cst = arith.constant dense<0.000000e+00> : vector<160x32xf32>
    %3 = tpu.matmul %1, %2, %cst {dimension_numbers = #tpu.dot_dimension_numbers<[1], [0], [0], [1], [0, 0, 1, 1], [], []>} : vector<160x32xbf16>, vector<32x32xbf16>, vector<160x32xf32> -> vector<160x32xf32>
    %c0_3 = arith.constant 0 : index
    %c0_4 = arith.constant 0 : index
    %4 = vector.load %arg3[%c0_3, %c0_4] : memref<1x32xf32, #tpu.memory_space<vmem>>, vector<1x32xf32>
    %5 = vector.broadcast %4 : vector<1x32xf32> to vector<160x32xf32>
    %6 = arith.addf %3, %5 : vector<160x32xf32>
    %c0_5 = arith.constant 0 : index
    %c0_6 = arith.constant 0 : index
    %7 = vector.load %arg4[%c0_5, %c0_6] : memref<160x32xf32, #tpu.memory_space<vmem>>, vector<160x32xf32>
    tpu.vector_store %arg4[%c0_5, %c0_6], %6 {strides = array<i32>} : memref<160x32xf32, #tpu.memory_space<vmem>>, vector<160x32xf32>,
    return
  }
  func.func @transform_0(%arg0: i32) -> (i32, i32) {
    %c0_i32 = arith.constant 0 : i32
    %c0_i32_0 = arith.constant 0 : i32
    return %arg0, %c0_i32 : i32, i32
  }
  func.func @transform_1(%arg0: i32) -> (i32, i32) {
    %c0_i32 = arith.constant 0 : i32
    %c0_i32_0 = arith.constant 0 : i32
    %c0_i32_1 = arith.constant 0 : i32
    return %c0_i32, %c0_i32_0 : i32, i32
  }
  func.func @transform_2(%arg0: i32) -> (i32, i32) {
    %c0_i32 = arith.constant 0 : i32
    %c0_i32_0 = arith.constant 0 : i32
    %c0_i32_1 = arith.constant 0 : i32
    return %c0_i32, %c0_i32_0 : i32, i32
  }
  func.func @transform_3(%arg0: i32) -> (i32, i32) {
    %c0_i32 = arith.constant 0 : i32
    %c0_i32_0 = arith.constant 0 : i32
    return %arg0, %c0_i32 : i32, i32
  }
}

</mosaic_0001>

<llo_original>
// kernel: tpu_custom_call.1
$region0: #{tpu_custom_call.1}
  #allocation0 [shape = 'u32[]', space=smem, size = 0x4, offset = 0x4, fixed_abs, tag = 'smem constant byte address 0x4 - core index']
  #allocation1 [shape = 'u32[144,128]{1,0:T(1,128)}', space=vmem, size = 0x12000, scoped, tag = 'internal scratch']
  %s0 = inlined_call_operand.hbm [shape: f32[160,32], index: 0, kind: input, shape index: {}]
  %s1 = inlined_call_operand.hbm [shape: bf16[32,32], index: 1, kind: input, shape index: {}]
  %s2 = inlined_call_operand.hbm [shape: f32[1,32], index: 2, kind: input, shape index: {}]
  %s3 = inlined_call_operand.hbm [shape: f32[160,32], index: 3, kind: output, shape index: {}]
  %s4 = sld [smem:[#allocation0]]
  $region34: #{tpu_custom_call.1} parent=0
    _
  %s6 = ssub.s32 1, %s4
  %s7 = scalar_select 0, %s6, %s4
  $region1: #{tpu_custom_call.1} parent=0
    #allocation2 [shape = 'u8[81920]{0}', space=vmem, size = 0x14000, scoped, tag = 'input window, operand 0, single buffered']
    #allocation3 [shape = 's32[1]{0}', space=sflag, size = 0x4, scoped, tag = 'scoped memory for tpu_custom_call.1']
    #allocation4 [shape = 's32[1]{0}', space=sflag, size = 0x4, scoped, tag = 'scoped memory for tpu_custom_call.1']
    #allocation5 [shape = 'u8[8192]{0}', space=vmem, size = 0x2000, scoped, tag = 'input window, operand 1, single buffered']
    #allocation6 [shape = 's32[1]{0}', space=sflag, size = 0x4, scoped, tag = 'scoped memory for tpu_custom_call.1']
    #allocation7 [shape = 'u8[512]{0}', space=vmem, size = 0x400, scoped, tag = 'input window, operand 2, single buffered']
    #allocation8 [shape = 'u8[81920]{0}', space=vmem, size = 0x14000, scoped, tag = 'output window, operand 0, single buffered']
    %8 = vsyncpa [#allocation3], 0
    %9 = vsyncpa [#allocation6], 0
    %10 = vsyncpa [#allocation4], 0
    // Predicated region
    $region2: #{tpu_custom_call.1} parent=1 // pred_check
      _
    $region3: #{tpu_custom_call.1} parent=1 // pred_check_branch
      %12 = sbr.rel (0) target = $region5
    $region4: #{tpu_custom_call.1} parent=1 // pred_region
      %s14 = ssub.s32 2560, 2560
      %15 = vsyncadd [#allocation3], %s14
      %s16 = sshll.u32 [#allocation2], 4
      %s17 = int_to_ptr.vmem [resolvable:$true] %s16
      %22 = dma.hbm_to_vmem [thread:$0]  %s0, 2560, %s17, [#allocation3], 128, 128, 8
    $region5: #{tpu_custom_call.1} parent=1 // pred_fallthru
      _
    // Predicated region
    $region6: #{tpu_custom_call.1} parent=1 // pred_check
      _
    $region7: #{tpu_custom_call.1} parent=1 // pred_check_branch
      %24 = sbr.rel (0) target = $region9
    $region8: #{tpu_custom_call.1} parent=1 // pred_region
      %s26 = ssub.s32 256, 256
      %27 = vsyncadd [#allocation6], %s26
      %s28 = sshll.u32 [#allocation5], 4
      %s29 = int_to_ptr.vmem [resolvable:$true] %s28
      %34 = dma.hbm_to_vmem [thread:$0]  %s1, 256, %s29, [#allocation6], 64, 64, 4
    $region9: #{tpu_custom_call.1} parent=1 // pred_fallthru
      _
    // Predicated region
    $region10: #{tpu_custom_call.1} parent=1 // pred_check
      _
    $region11: #{tpu_custom_call.1} parent=1 // pred_check_branch
      %36 = sbr.rel (0) target = $region13
    $region12: #{tpu_custom_call.1} parent=1 // pred_region
      %s38 = ssub.s32 16, 16
      %39 = vsyncadd [#allocation6], %s38
      %s41 = sshll.u32 [#allocation7], 4
      %s42 = int_to_ptr.vmem [resolvable:$true] %s41
      %44 = dma.hbm_to_vmem [thread:$0]  %s2, 16, %s42, [#allocation6]
    $region13: #{tpu_custom_call.1} parent=1 // pred_fallthru
      _
    // Predicated region
    $region14: #{tpu_custom_call.1} parent=1 // pred_check
      _
    $region15: #{tpu_custom_call.1} parent=1 // pred_check_branch
      %46 = sbr.rel (0) target = $region17
    $region16: #{tpu_custom_call.1} parent=1 // pred_region
      %47 = dma.done [#allocation3], 2560
    $region17: #{tpu_custom_call.1} parent=1 // pred_fallthru
      _
    // Predicated region
    $region18: #{tpu_custom_call.1} parent=1 // pred_check
      _
    $region19: #{tpu_custom_call.1} parent=1 // pred_check_branch
      %49 = sbr.rel (0) target = $region21
    $region20: #{tpu_custom_call.1} parent=1 // pred_region
      %50 = dma.done [#allocation6], 256
    $region21: #{tpu_custom_call.1} parent=1 // pred_fallthru
      _
    // Predicated region
    $region22: #{tpu_custom_call.1} parent=1 // pred_check
      _
    $region23: #{tpu_custom_call.1} parent=1 // pred_check_branch
      %52 = sbr.rel (0) target = $region25
    $region24: #{tpu_custom_call.1} parent=1 // pred_region
      %53 = dma.done [#allocation6], 16
    $region25: #{tpu_custom_call.1} parent=1 // pred_fallthru
      _
    %v55 = vld [vmem:[#allocation2] sm:$0xff]
    %v56 = vld [vmem:[#allocation2 + $0x8] sm:$0xff]
    %v57 = vld [vmem:[#allocation2 + $0x10] sm:$0xff]
    %v58 = vld [vmem:[#allocation2 + $0x18] sm:$0xff]
    %v59 = vld [vmem:[#allocation2 + $0x20] sm:$0xff]
    %v60 = vld [vmem:[#allocation2 + $0x28] sm:$0xff]
    %v61 = vld [vmem:[#allocation2 + $0x30] sm:$0xff]
    %v62 = vld [vmem:[#allocation2 + $0x38] sm:$0xff]
    %v63 = vld [vmem:[#allocation2 + $0x40] sm:$0xff]
    %v64 = vld [vmem:[#allocation2 + $0x48] sm:$0xff]
    %v65 = vld [vmem:[#allocation2 + $0x50] sm:$0xff]
    %v66 = vld [vmem:[#allocation2 + $0x58] sm:$0xff]
    %v67 = vld [vmem:[#allocation2 + $0x60] sm:$0xff]
    %v68 = vld [vmem:[#allocation2 + $0x68] sm:$0xff]
    %v69 = vld [vmem:[#allocation2 + $0x70] sm:$0xff]
    %v70 = vld [vmem:[#allocation2 + $0x78] sm:$0xff]
    %v71 = vld [vmem:[#allocation2 + $0x80] sm:$0xff]
    %v72 = vld [vmem:[#allocation2 + $0x88] sm:$0xff]
    %v73 = vld [vmem:[#allocation2 + $0x90] sm:$0xff]
    %v74 = vld [vmem:[#allocation2 + $0x98] sm:$0xff]
    %v75 = vpack.c.bf16 %v56, %v55
    %v76 = vpack.c.bf16 %v58, %v57
    %v77 = vpack.c.bf16 %v60, %v59
    %v78 = vpack.c.bf16 %v62, %v61
    %v79 = vpack.c.bf16 %v64, %v63
    %v80 = vpack.c.bf16 %v66, %v65
    %v81 = vpack.c.bf16 %v68, %v67
    %v82 = vpack.c.bf16 %v70, %v69
    %v83 = vpack.c.bf16 %v72, %v71
    %v84 = vpack.c.bf16 %v74, %v73
    %v85 = vld [vmem:[#allocation5] sm:$0xf]
    %v86 = vld [vmem:[#allocation5 + $0x4] sm:$0xf]
    %v87 = vld [vmem:[#allocation5 + $0x8] sm:$0xf]
    %v88 = vld [vmem:[#allocation5 + $0xc] sm:$0xf]
    %v89 = vld [vmem:[#allocation7] sm:$0x1]
    %v91 = vlaneseq
    %v92 = vshrl.u32 %v91, 7
    %v93 = vsub.s32 0, %v92
    %v94 = vrot.slane %v89, %v93
    %v100 = vunpack.c.l.b16 %v85
    %v101 = vunpack.c.l.b16 %v86
    %v102 = vunpack.c.l.b16 %v87
    %v103 = vunpack.c.l.b16 %v88
    %v104 = vpack.c.b16 %v101, %v100
    %v105 = vpack.c.b16 %v103, %v102
    %vm108 = vcmask 261120
    %v110 = vsel %vm108, %v75, 0
    %v113 = vsel %vm108, %v76, 0
    %v116 = vsel %vm108, %v77, 0
    %v119 = vsel %vm108, %v78, 0
    %v122 = vsel %vm108, %v79, 0
    %v125 = vsel %vm108, %v80, 0
    %v128 = vsel %vm108, %v81, 0
    %v131 = vsel %vm108, %v82, 0
    %v134 = vsel %vm108, %v83, 0
    %v137 = vsel %vm108, %v84, 0
    %139 = vmatprep.subr.bf16.mxu0 0
    %140 = vmatpush1.bf16.msra.mxu0 %v104
    %141 = vmatprep.subr.bf16.mxu0 0
    %142 = vmatpush1.bf16.msra.mxu0 %v105
    %143 = vmatprep.subr.bf16.mxu0 0
    %144 = vmatpush1.bf16.msra.mxu0 0
    %145 = vmatprep.subr.bf16.mxu0 0
    %146 = vmatpush1.bf16.msra.mxu0 0
    %147 = vmatprep.subr.bf16.mxu0 0
    %148 = vmatpush1.bf16.msra.mxu0 0
    %149 = vmatprep.subr.bf16.mxu0 0
    %150 = vmatpush1.bf16.msra.mxu0 0
    %151 = vmatprep.subr.bf16.mxu0 0
    %152 = vmatpush1.bf16.msra.mxu0 0
    %153 = vmatprep.subr.bf16.mxu0 0
    %154 = vmatpush1.bf16.msra.mxu0 0
    %155 = vmatprep.subr.bf16.mxu0 0
    %156 = vmatpush1.bf16.msra.mxu0 0
    %157 = vmatprep.subr.bf16.mxu0 0
    %158 = vmatpush1.bf16.msra.mxu0 0
    %159 = vmatprep.subr.bf16.mxu0 0
    %160 = vmatpush1.bf16.msra.mxu0 0
    %161 = vmatprep.subr.bf16.mxu0 0
    %162 = vmatpush1.bf16.msra.mxu0 0
    %163 = vmatprep.subr.bf16.mxu0 0
    %164 = vmatpush1.bf16.msra.mxu0 0
    %165 = vmatprep.subr.bf16.mxu0 0
    %166 = vmatpush1.bf16.msra.mxu0 0
    %167 = vmatprep.subr.bf16.mxu0 0
    %168 = vmatpush1.bf16.msra.mxu0 0
    %169 = vmatprep.subr.bf16.mxu0 0
    %170 = vmatpush1.bf16.msra.mxu0 0
    %171 = vmatprep.mubr.bf16.mxu0 0
    %172 = vmatmul.mubr.bf16.gmra.mrb[0].mxu0 %v110
    %v173 = vpop.f32.mrb[0].mxu0
    %v174 = vadd.f32 %v94, %v173
    %v175 = vpop.f32.mrb[0].mxu0
    %v176 = vpop.f32.mrb[0].mxu0
    %v177 = vadd.f32 %v94, %v176
    %v178 = vpop.f32.mrb[0].mxu0
    %179 = vmatprep.mubr.bf16.mxu0 0
    %180 = vmatmul.mubr.bf16.gmra.mrb[0].mxu0 %v113
    %v181 = vpop.f32.mrb[0].mxu0
    %v182 = vadd.f32 %v94, %v181
    %v183 = vpop.f32.mrb[0].mxu0
    %v184 = vpop.f32.mrb[0].mxu0
    %v185 = vadd.f32 %v94, %v184
    %v186 = vpop.f32.mrb[0].mxu0
    %187 = vmatprep.mubr.bf16.mxu0 0
    %188 = vmatmul.mubr.bf16.gmra.mrb[0].mxu0 %v116
    %v189 = vpop.f32.mrb[0].mxu0
    %v190 = vadd.f32 %v94, %v189
    %v191 = vpop.f32.mrb[0].mxu0
    %v192 = vpop.f32.mrb[0].mxu0
    %v193 = vadd.f32 %v94, %v192
    %v194 = vpop.f32.mrb[0].mxu0
    %195 = vmatprep.mubr.bf16.mxu0 0
    %196 = vmatmul.mubr.bf16.gmra.mrb[0].mxu0 %v119
    %v197 = vpop.f32.mrb[0].mxu0
    %v198 = vadd.f32 %v94, %v197
    %v199 = vpop.f32.mrb[0].mxu0
    %v200 = vpop.f32.mrb[0].mxu0
    %v201 = vadd.f32 %v94, %v200
    %v202 = vpop.f32.mrb[0].mxu0
    %203 = vmatprep.mubr.bf16.mxu0 0
    %204 = vmatmul.mubr.bf16.gmra.mrb[0].mxu0 %v122
    %v205 = vpop.f32.mrb[0].mxu0
    %v206 = vadd.f32 %v94, %v205
    %v207 = vpop.f32.mrb[0].mxu0
    %v208 = vpop.f32.mrb[0].mxu0
    %v209 = vadd.f32 %v94, %v208
    %v210 = vpop.f32.mrb[0].mxu0
    %211 = vmatprep.mubr.bf16.mxu0 0
    %212 = vmatmul.mubr.bf16.gmra.mrb[0].mxu0 %v125
    %v213 = vpop.f32.mrb[0].mxu0
    %v214 = vadd.f32 %v94, %v213
    %v215 = vpop.f32.mrb[0].mxu0
    %v216 = vpop.f32.mrb[0].mxu0
    %v217 = vadd.f32 %v94, %v216
    %v218 = vpop.f32.mrb[0].mxu0
    %219 = vmatprep.mubr.bf16.mxu0 0
    %220 = vmatmul.mubr.bf16.gmra.mrb[0].mxu0 %v128
    %v221 = vpop.f32.mrb[0].mxu0
    %v222 = vadd.f32 %v94, %v221
    %v223 = vpop.f32.mrb[0].mxu0
    %v224 = vpop.f32.mrb[0].mxu0
    %v225 = vadd.f32 %v94, %v224
    %v226 = vpop.f32.mrb[0].mxu0
    %227 = vmatprep.mubr.bf16.mxu0 0
    %228 = vmatmul.mubr.bf16.gmra.mrb[0].mxu0 %v131
    %v229 = vpop.f32.mrb[0].mxu0
    %v230 = vadd.f32 %v94, %v229
    %v231 = vpop.f32.mrb[0].mxu0
    %v232 = vpop.f32.mrb[0].mxu0
    %v233 = vadd.f32 %v94, %v232
    %v234 = vpop.f32.mrb[0].mxu0
    %235 = vmatprep.mubr.bf16.mxu0 0
    %236 = vmatmul.mubr.bf16.gmra.mrb[0].mxu0 %v134
    %v237 = vpop.f32.mrb[0].mxu0
    %v238 = vadd.f32 %v94, %v237
    %v239 = vpop.f32.mrb[0].mxu0
    %v240 = vpop.f32.mrb[0].mxu0
    %v241 = vadd.f32 %v94, %v240
    %v242 = vpop.f32.mrb[0].mxu0
    %243 = vmatprep.mubr.bf16.mxu0 0
    %244 = vmatmul.mubr.bf16.gmra.mrb[0].mxu0 %v137
    %v245 = vpop.f32.mrb[0].mxu0
    %v246 = vadd.f32 %v94, %v245
    %v247 = vpop.f32.mrb[0].mxu0
    %v248 = vpop.f32.mrb[0].mxu0
    %v249 = vadd.f32 %v94, %v248
    %v250 = vpop.f32.mrb[0].mxu0
    %251 = vdwg.mxu0
    %252 = vst.msk [vmem:[#allocation8] sm:$0xff] %vm108, %v174
    %253 = vst.msk [vmem:[#allocation8 + $0x8] sm:$0xff] %vm108, %v177
    %254 = vst.msk [vmem:[#allocation8 + $0x10] sm:$0xff] %vm108, %v182
    %255 = vst.msk [vmem:[#allocation8 + $0x18] sm:$0xff] %vm108, %v185
    %256 = vst.msk [vmem:[#allocation8 + $0x20] sm:$0xff] %vm108, %v190
    %257 = vst.msk [vmem:[#allocation8 + $0x28] sm:$0xff] %vm108, %v193
    %258 = vst.msk [vmem:[#allocation8 + $0x30] sm:$0xff] %vm108, %v198
    %259 = vst.msk [vmem:[#allocation8 + $0x38] sm:$0xff] %vm108, %v201
    %260 = vst.msk [vmem:[#allocation8 + $0x40] sm:$0xff] %vm108, %v206
    %261 = vst.msk [vmem:[#allocation8 + $0x48] sm:$0xff] %vm108, %v209
    %262 = vst.msk [vmem:[#allocation8 + $0x50] sm:$0xff] %vm108, %v214
    %263 = vst.msk [vmem:[#allocation8 + $0x58] sm:$0xff] %vm108, %v217
    %264 = vst.msk [vmem:[#allocation8 + $0x60] sm:$0xff] %vm108, %v222
    %265 = vst.msk [vmem:[#allocation8 + $0x68] sm:$0xff] %vm108, %v225
    %266 = vst.msk [vmem:[#allocation8 + $0x70] sm:$0xff] %vm108, %v230
    %267 = vst.msk [vmem:[#allocation8 + $0x78] sm:$0xff] %vm108, %v233
    %268 = vst.msk [vmem:[#allocation8 + $0x80] sm:$0xff] %vm108, %v238
    %269 = vst.msk [vmem:[#allocation8 + $0x88] sm:$0xff] %vm108, %v241
    %270 = vst.msk [vmem:[#allocation8 + $0x90] sm:$0xff] %vm108, %v246
    %271 = vst.msk [vmem:[#allocation8 + $0x98] sm:$0xff] %vm108, %v249
    // Predicated region
    $region26: #{tpu_custom_call.1} parent=1 // pred_check
      _
    $region27: #{tpu_custom_call.1} parent=1 // pred_check_branch
      %273 = sbr.rel (0) target = $region29
    $region28: #{tpu_custom_call.1} parent=1 // pred_region
      %s275 = ssub.s32 2560, 2560
      %276 = vsyncadd [#allocation4], %s275
      %s277 = sshll.u32 [#allocation8], 4
      %s278 = int_to_ptr.vmem [resolvable:$true] %s277
      %283 = dma.vmem_to_hbm [thread:$0]  %s278, 2560, %s3, [#allocation4], 128, 128, 8
    $region29: #{tpu_custom_call.1} parent=1 // pred_fallthru
      _
    // Predicated region
    $region30: #{tpu_custom_call.1} parent=1 // pred_check
      _
    $region31: #{tpu_custom_call.1} parent=1 // pred_check_branch
      %285 = sbr.rel (0) target = $region33
    $region32: #{tpu_custom_call.1} parent=1 // pred_region
      %286 = dma.done [#allocation4], 2560
    $region33: #{tpu_custom_call.1} parent=1 // pred_fallthru
      _
    %287 = vsyncpa [#allocation3], 1
    %288 = vsyncpa [#allocation6], 1
    %289 = vsyncpa [#allocation4], 1

</llo_original>
